<compile_context>
chip_gen: v7x
topology: tpu7x:2x2x1
jax: 0.10.0
libtpu: 0.0.40
codegen_flags: <defaults>
</compile_context>

<pallas_src>
import jax
import jax.numpy as jnp
from jax.experimental import pallas as pl
from jax.experimental.pallas import tpu as pltpu

EPS = 1e-5
LANE = 128
H1 = 512
H2 = 256


def _round_up(n, m):
    return ((n + m - 1) // m) * m


def _vmem_limit_bytes():
    # Leave double-buffer headroom below physical VMEM (64 MiB v7x, 128 MiB v5e/v6e).
    try:
        cap = int(getattr(pltpu.get_tpu_info(), "vmem_capacity_bytes", 64 << 20))
    except Exception:
        cap = 64 << 20
    return int(min(max(cap - (16 << 20), 32 << 20), 100 << 20))


# ---------------------------------------------------------------------------
# Monolithic kernel: whole (padded) batch resident in VMEM.  Right structure up
# to a couple thousand rows; used for small B.
# ---------------------------------------------------------------------------
def strategy_net_kernel(inv_b_ref, x_ref, w1_ref, g1_ref, be1_ref,
                        w2_ref, g2_ref, be2_ref, w3_ref, b3_ref, out_ref):
    inv_b = inv_b_ref[0]

    def bn_relu_bf16(a, g, be):
        # One-pass batch stats (f32) folded into a single scale/shift FMA, emit bf16.
        s = jnp.sum(a, axis=0, keepdims=True)
        ss = jnp.sum(a * a, axis=0, keepdims=True)
        m = s * inv_b
        v = jnp.maximum(ss * inv_b - m * m, 0.0)
        scale = g * jax.lax.rsqrt(v + EPS)          # EUP rsqrt on a (1, F) row
        shift = be - m * scale
        return jnp.maximum(a * scale + shift, 0.0).astype(jnp.bfloat16)

    a1 = jnp.dot(x_ref[...], w1_ref[...], preferred_element_type=jnp.float32)
    h1 = bn_relu_bf16(a1, g1_ref[...], be1_ref[...])
    a2 = jnp.dot(h1, w2_ref[...], preferred_element_type=jnp.float32)
    h2 = bn_relu_bf16(a2, g2_ref[...], be2_ref[...])
    out_ref[...] = (jnp.dot(h2, w3_ref[...], preferred_element_type=jnp.float32)
                    + b3_ref[...]).astype(out_ref.dtype)


# ---------------------------------------------------------------------------
# Batch-tiled kernel: grid = (3 sweeps, batch tiles).
#   sweep 0: a1 = x@w1, accumulate BN1 sum/sumsq; fold into scale/shift on last tile
#   sweep 1: recompute a1, apply BN1+ReLU, a2 = h1@w2, accumulate BN2 stats; fold
#   sweep 2: recompute a1,a2, apply BN1/BN2+ReLU, head matmul, write output tile
# Weights use constant index_maps (DMA once, stay resident); x/out tiles are
# double-buffered by the BlockSpec pipeline.  Both axes are "arbitrary"
# (stat accumulation and sweep ordering are sequential dependencies).
# ---------------------------------------------------------------------------
def strategy_net_tiled_kernel(inv_b_ref, x_ref, w1_ref, g1_ref, be1_ref,
                              w2_ref, g2_ref, be2_ref, w3_ref, b3_ref,
                              out_ref, stat1, stat2):
    phase = pl.program_id(0)
    i = pl.program_id(1)
    n_tiles = pl.num_programs(1)
    inv_b = inv_b_ref[0]

    a1 = jnp.dot(x_ref[...], w1_ref[...], preferred_element_type=jnp.float32)

    @pl.when(jnp.logical_and(phase == 0, i == 0))
    def _():
        stat1[...] = jnp.zeros_like(stat1)

    @pl.when(phase == 0)
    def _():
        stat1[0:1, :] += jnp.sum(a1, axis=0, keepdims=True)
        stat1[1:2, :] += jnp.sum(a1 * a1, axis=0, keepdims=True)

    @pl.when(jnp.logical_and(phase == 0, i == n_tiles - 1))
    def _():
        m = stat1[0:1, :] * inv_b
        v = jnp.maximum(stat1[1:2, :] * inv_b - m * m, 0.0)
        scale = g1_ref[...] * jax.lax.rsqrt(v + EPS)
        shift = be1_ref[...] - m * scale
        stat1[0:1, :] = scale
        stat1[1:2, :] = shift

    @pl.when(phase >= 1)
    def _():
        h1 = jnp.maximum(a1 * stat1[0:1, :] + stat1[1:2, :], 0.0).astype(jnp.bfloat16)
        a2 = jnp.dot(h1, w2_ref[...], preferred_element_type=jnp.float32)

        @pl.when(jnp.logical_and(phase == 1, i == 0))
        def _():
            stat2[...] = jnp.zeros_like(stat2)

        @pl.when(phase == 1)
        def _():
            stat2[0:1, :] += jnp.sum(a2, axis=0, keepdims=True)
            stat2[1:2, :] += jnp.sum(a2 * a2, axis=0, keepdims=True)

        @pl.when(jnp.logical_and(phase == 1, i == n_tiles - 1))
        def _():
            m = stat2[0:1, :] * inv_b
            v = jnp.maximum(stat2[1:2, :] * inv_b - m * m, 0.0)
            scale = g2_ref[...] * jax.lax.rsqrt(v + EPS)
            shift = be2_ref[...] - m * scale
            stat2[0:1, :] = scale
            stat2[1:2, :] = shift

        @pl.when(phase == 2)
        def _():
            h2 = jnp.maximum(a2 * stat2[0:1, :] + stat2[1:2, :], 0.0).astype(jnp.bfloat16)
            out_ref[...] = (jnp.dot(h2, w3_ref[...], preferred_element_type=jnp.float32)
                            + b3_ref[...]).astype(out_ref.dtype)


def strategy_net_forward(x, params, num_actions, *, batch_tile=512,
                         out_dtype=jnp.float32):
    """x: (B, input_size) f32.  params: dict from init_params (bf16 weights, padded).

    NOTE: batch-stat BN couples every row; the batch is never padded (padded rows
    would corrupt the statistics), so the tiled path requires B % batch_tile == 0.
    """
    B = x.shape[0]
    in_pad = params["w1_t"].shape[0]
    out_pad = params["w3_t"].shape[1]

    # Fused pad + cast in the wrapper: bf16 x halves the input DMA bytes.
    xb = jnp.pad(x.astype(jnp.bfloat16), ((0, 0), (0, in_pad - x.shape[1])))
    inv_b = jnp.full((1,), 1.0 / B, jnp.float32)   # runtime SMEM scalar, not a closure

    args = (inv_b, xb,
            params["w1_t"], params["g1"], params["be1"],
            params["w2_t"], params["g2"], params["be2"],
            params["w3_t"], params["b3"])

    weight_bytes = sum(int(params[k].size) * 2 for k in ("w1_t", "w2_t", "w3_t"))
    cost = pl.CostEstimate(
        flops=2 * B * (in_pad * H1 + H1 * H2 + H2 * out_pad),
        transcendentals=H1 + H2,
        bytes_accessed=int(xb.size * 2 + B * out_pad * jnp.dtype(out_dtype).itemsize
                           + weight_bytes + (H1 + H2) * 2 * 4 + out_pad * 4),
    )
    vmem_limit = _vmem_limit_bytes()

    use_tiled = (batch_tile is not None and B % batch_tile == 0
                 and B // batch_tile >= 2)

    if not use_tiled:
        out = pl.pallas_call(
            strategy_net_kernel,
            out_shape=jax.ShapeDtypeStruct((B, out_pad), out_dtype),
            in_specs=[pl.BlockSpec(memory_space=pltpu.MemorySpace.SMEM)]
                     + [pl.BlockSpec(memory_space=pltpu.MemorySpace.VMEM)] * 9,
            out_specs=pl.BlockSpec(memory_space=pltpu.MemorySpace.VMEM),
            compiler_params=pltpu.CompilerParams(vmem_limit_bytes=vmem_limit),
            cost_estimate=cost,
        )(*args)
    else:
        tb = batch_tile
        n_tiles = B // tb

        def const(shape):
            return pl.BlockSpec(shape, lambda p, i: (0, 0))

        out = pl.pallas_call(
            strategy_net_tiled_kernel,
            out_shape=jax.ShapeDtypeStruct((B, out_pad), out_dtype),
            grid=(3, n_tiles),
            in_specs=[
                pl.BlockSpec(memory_space=pltpu.MemorySpace.SMEM),   # inv_b
                pl.BlockSpec((tb, in_pad), lambda p, i: (i, 0)),     # x tile
                const((in_pad, H1)), const((1, H1)), const((1, H1)),
                const((H1, H2)), const((1, H2)), const((1, H2)),
                const((H2, out_pad)), const((1, out_pad)),
            ],
            # Output block only advances during the apply sweep (phase 2), so no
            # garbage tiles are ever written back to HBM.
            out_specs=pl.BlockSpec((tb, out_pad),
                                   lambda p, i: (jnp.where(p == 2, i, 0), 0)),
            scratch_shapes=[pltpu.VMEM((2, H1), jnp.float32),   # BN1 sum/sumsq -> scale/shift
                            pltpu.VMEM((2, H2), jnp.float32)],  # BN2 sum/sumsq -> scale/shift
            compiler_params=pltpu.CompilerParams(
                vmem_limit_bytes=vmem_limit,
                dimension_semantics=("arbitrary", "arbitrary")),
            cost_estimate=cost,
        )(*args)

    return out[:, :num_actions]


def init_params(key, input_size, num_actions):
    """Mirrors StrategyNet.__init__: kaiming_normal_(fan_in, relu) Linear weights,
    default uniform head bias, BN gamma=1 / beta=0.  Weights stored transposed
    (in, out), bf16, zero-padded to lane-dense shapes.  b1/b2 omitted (cancelled
    exactly by batch-statistics BN)."""
    ks = jax.random.split(key, 4)
    in_pad = _round_up(input_size, LANE)
    out_pad = _round_up(num_actions, LANE)

    def kaiming_t(k, fan_in, fan_out, pad_in=None, pad_out=None):
        std = (2.0 / fan_in) ** 0.5
        w = jax.random.normal(k, (fan_out, fan_in), jnp.float32) * std  # torch (out, in)
        w_t = w.T                                                        # (in, out)
        pi = pad_in if pad_in is not None else fan_in
        po = pad_out if pad_out is not None else fan_out
        w_t = jnp.pad(w_t, ((0, pi - fan_in), (0, po - fan_out)))
        return w_t.astype(jnp.bfloat16)

    def bias(k, fan_in, fan_out, pad_out):
        bound = 1.0 / (fan_in ** 0.5)
        b = jax.random.uniform(k, (1, fan_out), jnp.float32, -bound, bound)
        return jnp.pad(b, ((0, 0), (0, pad_out - fan_out)))

    return {
        "w1_t": kaiming_t(ks[0], input_size, H1, pad_in=in_pad),
        "g1":   jnp.ones((1, H1), jnp.float32),
        "be1":  jnp.zeros((1, H1), jnp.float32),
        "w2_t": kaiming_t(ks[1], H1, H2),
        "g2":   jnp.ones((1, H2), jnp.float32),
        "be2":  jnp.zeros((1, H2), jnp.float32),
        "w3_t": kaiming_t(ks[2], H2, num_actions, pad_out=out_pad),
        "b3":   bias(ks[3], H2, num_actions, out_pad),
    }


def reference_forward(x, params, num_actions):
    """Pure-JAX reference with identical math (bf16 dot inputs, f32 acc, folded
    batch-stat BN, identity dropout).  Validates kernel plumbing."""
    in_pad = params["w1_t"].shape[0]
    xb = jnp.pad(x.astype(jnp.bfloat16), ((0, 0), (0, in_pad - x.shape[1])))

    def bn_relu(a, g, be):
        m = a.mean(0, keepdims=True)
        v = jnp.maximum((a * a).mean(0, keepdims=True) - m * m, 0.0)
        scale = g * jax.lax.rsqrt(v + EPS)
        shift = be - m * scale
        return jnp.maximum(a * scale + shift, 0.0).astype(jnp.bfloat16)

    a1 = jnp.dot(xb, params["w1_t"], preferred_element_type=jnp.float32)
    h1 = bn_relu(a1, params["g1"], params["be1"])
    a2 = jnp.dot(h1, params["w2_t"], preferred_element_type=jnp.float32)
    h2 = bn_relu(a2, params["g2"], params["be2"])
    out = (jnp.dot(h2, params["w3_t"], preferred_element_type=jnp.float32)
           + params["b3"])
    return out[:, :num_actions]


if __name__ == "__main__":
    key = jax.random.PRNGKey(0)
    k_x, k_p, k_x2 = jax.random.split(key, 3)

    input_size = 32
    num_actions = 8
    params = init_params(k_p, input_size, num_actions)

    # Small batch -> monolithic VMEM-resident path.
    x_small = jax.random.normal(k_x, (8, input_size), jnp.float32)
    out_small = jax.block_until_ready(strategy_net_forward(x_small, params, num_actions))
    ref_small = reference_forward(x_small, params, num_actions)
    assert out_small.shape == (8, num_actions)
    assert jnp.allclose(out_small, ref_small, atol=2e-2, rtol=2e-2), \
        "monolithic path mismatch vs JAX reference"

    # Larger batch -> batch-tiled three-sweep pipeline (tiny tile to exercise it).
    x_big = jax.random.normal(k_x2, (64, input_size), jnp.float32)
    out_big = jax.block_until_ready(
        strategy_net_forward(x_big, params, num_actions, batch_tile=16))
    ref_big = reference_forward(x_big, params, num_actions)
    assert out_big.shape == (64, num_actions)
    assert jnp.allclose(out_big, ref_big, atol=2e-2, rtol=2e-2), \
        "tiled path mismatch vs JAX reference"

    print("KERNEL_OK")
</pallas_src>

<mosaic_0001>
module attributes {stable_mosaic.version = 11 : i64} {
  func.func @strategy_net_kernel(%arg0: memref<1xf32, #tpu.memory_space<smem>>, %arg1: memref<8x128xbf16, #tpu.memory_space<vmem>>, %arg2: memref<128x512xbf16, #tpu.memory_space<vmem>>, %arg3: memref<1x512xf32, #tpu.memory_space<vmem>>, %arg4: memref<1x512xf32, #tpu.memory_space<vmem>>, %arg5: memref<512x256xbf16, #tpu.memory_space<vmem>>, %arg6: memref<1x256xf32, #tpu.memory_space<vmem>>, %arg7: memref<1x256xf32, #tpu.memory_space<vmem>>, %arg8: memref<256x128xbf16, #tpu.memory_space<vmem>>, %arg9: memref<1x128xf32, #tpu.memory_space<vmem>>, %arg10: memref<8x128xf32, #tpu.memory_space<vmem>>) attributes {dimension_semantics = [], scalar_prefetch = 0 : i64, scratch_operands = 0 : i64, tpu.core_type = #tpu.core_type<tc>} {
    %c0 = arith.constant 0 : index
    %0 = memref.load %arg0[%c0] : memref<1xf32, #tpu.memory_space<smem>>
    %c0_0 = arith.constant 0 : index
    %c0_1 = arith.constant 0 : index
    %1 = vector.load %arg1[%c0_0, %c0_1] : memref<8x128xbf16, #tpu.memory_space<vmem>>, vector<8x128xbf16>
    %c0_2 = arith.constant 0 : index
    %c0_3 = arith.constant 0 : index
    %2 = vector.load %arg2[%c0_2, %c0_3] : memref<128x512xbf16, #tpu.memory_space<vmem>>, vector<128x512xbf16>
    %cst = arith.constant dense<0.000000e+00> : vector<8x512xf32>
    %3 = tpu.matmul %1, %2, %cst {dimension_numbers = #tpu.dot_dimension_numbers<[1], [0], [0], [1], [0, 0, 1, 1], [], []>} : vector<8x128xbf16>, vector<128x512xbf16>, vector<8x512xf32> -> vector<8x512xf32>
    %c0_4 = arith.constant 0 : index
    %c0_5 = arith.constant 0 : index
    %4 = vector.load %arg3[%c0_4, %c0_5] : memref<1x512xf32, #tpu.memory_space<vmem>>, vector<1x512xf32>
    %c0_6 = arith.constant 0 : index
    %c0_7 = arith.constant 0 : index
    %5 = vector.load %arg4[%c0_6, %c0_7] : memref<1x512xf32, #tpu.memory_space<vmem>>, vector<1x512xf32>
    %cst_8 = arith.constant dense<0.000000e+00> : vector<512xf32>
    %6 = vector.multi_reduction <add>, %3, %cst_8 [0] : vector<8x512xf32> to vector<512xf32>
    %7 = vector.shape_cast %6 : vector<512xf32> to vector<1x512xf32>
    %8 = arith.mulf %3, %3 : vector<8x512xf32>
    %cst_9 = arith.constant dense<0.000000e+00> : vector<512xf32>
    %9 = vector.multi_reduction <add>, %8, %cst_9 [0] : vector<8x512xf32> to vector<512xf32>
    %10 = vector.shape_cast %9 : vector<512xf32> to vector<1x512xf32>
    %11 = vector.broadcast %0 : f32 to vector<1x512xf32>
    %12 = arith.mulf %7, %11 : vector<1x512xf32>
    %13 = vector.broadcast %0 : f32 to vector<1x512xf32>
    %14 = arith.mulf %10, %13 : vector<1x512xf32>
    %15 = arith.mulf %12, %12 : vector<1x512xf32>
    %16 = arith.subf %14, %15 : vector<1x512xf32>
    %cst_10 = arith.constant 0.000000e+00 : f32
    %17 = vector.broadcast %cst_10 : f32 to vector<1x512xf32>
    %18 = arith.maximumf %16, %17 : vector<1x512xf32>
    %cst_11 = arith.constant 9.99999974E-6 : f32
    %19 = vector.broadcast %cst_11 : f32 to vector<1x512xf32>
    %20 = arith.addf %18, %19 : vector<1x512xf32>
    %21 = math.rsqrt %20 : vector<1x512xf32>
    %22 = arith.mulf %4, %21 : vector<1x512xf32>
    %23 = arith.mulf %12, %22 : vector<1x512xf32>
    %24 = arith.subf %5, %23 : vector<1x512xf32>
    %25 = vector.broadcast %22 : vector<1x512xf32> to vector<8x512xf32>
    %26 = arith.mulf %3, %25 : vector<8x512xf32>
    %27 = vector.broadcast %24 : vector<1x512xf32> to vector<8x512xf32>
    %28 = arith.addf %26, %27 : vector<8x512xf32>
    %cst_12 = arith.constant 0.000000e+00 : f32
    %29 = vector.broadcast %cst_12 : f32 to vector<8x512xf32>
    %30 = arith.maximumf %28, %29 : vector<8x512xf32>
    %31 = arith.truncf %30 : vector<8x512xf32> to vector<8x512xbf16>
    %c0_13 = arith.constant 0 : index
    %c0_14 = arith.constant 0 : index
    %32 = vector.load %arg5[%c0_13, %c0_14] : memref<512x256xbf16, #tpu.memory_space<vmem>>, vector<512x256xbf16>
    %cst_15 = arith.constant dense<0.000000e+00> : vector<8x256xf32>
    %33 = tpu.matmul %31, %32, %cst_15 {dimension_numbers = #tpu.dot_dimension_numbers<[1], [0], [0], [1], [0, 0, 1, 1], [], []>} : vector<8x512xbf16>, vector<512x256xbf16>, vector<8x256xf32> -> vector<8x256xf32>
    %c0_16 = arith.constant 0 : index
    %c0_17 = arith.constant 0 : index
    %34 = vector.load %arg6[%c0_16, %c0_17] : memref<1x256xf32, #tpu.memory_space<vmem>>, vector<1x256xf32>
    %c0_18 = arith.constant 0 : index
    %c0_19 = arith.constant 0 : index
    %35 = vector.load %arg7[%c0_18, %c0_19] : memref<1x256xf32, #tpu.memory_space<vmem>>, vector<1x256xf32>
    %cst_20 = arith.constant dense<0.000000e+00> : vector<256xf32>
    %36 = vector.multi_reduction <add>, %33, %cst_20 [0] : vector<8x256xf32> to vector<256xf32>
    %37 = vector.shape_cast %36 : vector<256xf32> to vector<1x256xf32>
    %38 = arith.mulf %33, %33 : vector<8x256xf32>
    %cst_21 = arith.constant dense<0.000000e+00> : vector<256xf32>
    %39 = vector.multi_reduction <add>, %38, %cst_21 [0] : vector<8x256xf32> to vector<256xf32>
    %40 = vector.shape_cast %39 : vector<256xf32> to vector<1x256xf32>
    %41 = vector.broadcast %0 : f32 to vector<1x256xf32>
    %42 = arith.mulf %37, %41 : vector<1x256xf32>
    %43 = vector.broadcast %0 : f32 to vector<1x256xf32>
    %44 = arith.mulf %40, %43 : vector<1x256xf32>
    %45 = arith.mulf %42, %42 : vector<1x256xf32>
    %46 = arith.subf %44, %45 : vector<1x256xf32>
    %cst_22 = arith.constant 0.000000e+00 : f32
    %47 = vector.broadcast %cst_22 : f32 to vector<1x256xf32>
    %48 = arith.maximumf %46, %47 : vector<1x256xf32>
    %cst_23 = arith.constant 9.99999974E-6 : f32
    %49 = vector.broadcast %cst_23 : f32 to vector<1x256xf32>
    %50 = arith.addf %48, %49 : vector<1x256xf32>
    %51 = math.rsqrt %50 : vector<1x256xf32>
    %52 = arith.mulf %34, %51 : vector<1x256xf32>
    %53 = arith.mulf %42, %52 : vector<1x256xf32>
    %54 = arith.subf %35, %53 : vector<1x256xf32>
    %55 = vector.broadcast %52 : vector<1x256xf32> to vector<8x256xf32>
    %56 = arith.mulf %33, %55 : vector<8x256xf32>
    %57 = vector.broadcast %54 : vector<1x256xf32> to vector<8x256xf32>
    %58 = arith.addf %56, %57 : vector<8x256xf32>
    %cst_24 = arith.constant 0.000000e+00 : f32
    %59 = vector.broadcast %cst_24 : f32 to vector<8x256xf32>
    %60 = arith.maximumf %58, %59 : vector<8x256xf32>
    %61 = arith.truncf %60 : vector<8x256xf32> to vector<8x256xbf16>
    %c0_25 = arith.constant 0 : index
    %c0_26 = arith.constant 0 : index
    %62 = vector.load %arg8[%c0_25, %c0_26] : memref<256x128xbf16, #tpu.memory_space<vmem>>, vector<256x128xbf16>
    %cst_27 = arith.constant dense<0.000000e+00> : vector<8x128xf32>
    %63 = tpu.matmul %61, %62, %cst_27 {dimension_numbers = #tpu.dot_dimension_numbers<[1], [0], [0], [1], [0, 0, 1, 1], [], []>} : vector<8x256xbf16>, vector<256x128xbf16>, vector<8x128xf32> -> vector<8x128xf32>
    %c0_28 = arith.constant 0 : index
    %c0_29 = arith.constant 0 : index
    %64 = vector.load %arg9[%c0_28, %c0_29] : memref<1x128xf32, #tpu.memory_space<vmem>>, vector<1x128xf32>
    %65 = vector.broadcast %64 : vector<1x128xf32> to vector<8x128xf32>
    %66 = arith.addf %63, %65 : vector<8x128xf32>
    %c0_30 = arith.constant 0 : index
    %c0_31 = arith.constant 0 : index
    %67 = vector.load %arg10[%c0_30, %c0_31] : memref<8x128xf32, #tpu.memory_space<vmem>>, vector<8x128xf32>
    tpu.vector_store %arg10[%c0_30, %c0_31], %66 {strides = array<i32>} : memref<8x128xf32, #tpu.memory_space<vmem>>, vector<8x128xf32>,
    return
  }
}

</mosaic_0001>

<llo_original>
// kernel: tpu_custom_call.1
$region0: #{tpu_custom_call.1}
  #allocation0 [shape = 'u32[]', space=smem, size = 0x4, offset = 0x4, fixed_abs, tag = 'smem constant byte address 0x4 - core index']
  #allocation1 [shape = 'u32[144,128]{1,0:T(1,128)}', space=vmem, size = 0x12000, scoped, tag = 'internal scratch']
  #allocation2 [shape = 'f32[1]{0:T(128)S(6)}', space=smem, size = 0x200, scoped, tag = 'scoped memory for tpu_custom_call.1']
  %s0 = inlined_call_operand.<no memory space> [shape: f32[1], index: 0, kind: input, shape index: {}]
  %s1 = inlined_call_operand.hbm [shape: bf16[8,128], index: 1, kind: input, shape index: {}]
  %s2 = inlined_call_operand.hbm [shape: bf16[128,512], index: 2, kind: input, shape index: {}]
  %s3 = inlined_call_operand.vmem [shape: f32[1,512], index: 3, kind: input, shape index: {}]
  %s4 = inlined_call_operand.vmem [shape: f32[1,512], index: 4, kind: input, shape index: {}]
  %s5 = inlined_call_operand.hbm [shape: bf16[512,256], index: 5, kind: input, shape index: {}]
  %s6 = inlined_call_operand.vmem [shape: f32[1,256], index: 6, kind: input, shape index: {}]
  %s7 = inlined_call_operand.vmem [shape: f32[1,256], index: 7, kind: input, shape index: {}]
  %s8 = inlined_call_operand.hbm [shape: bf16[256,128], index: 8, kind: input, shape index: {}]
  %s9 = inlined_call_operand.vmem [shape: f32[1,128], index: 9, kind: input, shape index: {}]
  %s10 = inlined_call_operand.hbm [shape: f32[8,128], index: 10, kind: output, shape index: {}]
  %s11 = sld [smem:[#allocation0]]
  $region66: #{tpu_custom_call.1} parent=0
    _
  %s13 = ssub.s32 1, %s11
  %s14 = scalar_select 0, %s13, %s11
  %15 = sst [smem:[#allocation2]] %s0
  $region1: #{tpu_custom_call.1} parent=0
    #allocation3 [shape = 'u8[2048]{0}', space=vmem, size = 0x800, scoped, tag = 'input window, operand 1, single buffered']
    #allocation4 [shape = 's32[1]{0}', space=sflag, size = 0x4, scoped, tag = 'scoped memory for tpu_custom_call.1']
    #allocation5 [shape = 's32[1]{0}', space=sflag, size = 0x4, scoped, tag = 'scoped memory for tpu_custom_call.1']
    #allocation6 [shape = 'u8[131072]{0}', space=vmem, size = 0x20000, scoped, tag = 'input window, operand 2, single buffered']
    #allocation7 [shape = 's32[1]{0}', space=sflag, size = 0x4, scoped, tag = 'scoped memory for tpu_custom_call.1']
    #allocation8 [shape = 'u8[262144]{0}', space=vmem, size = 0x40000, scoped, tag = 'input window, operand 5, single buffered']
    #allocation9 [shape = 'u8[65536]{0}', space=vmem, size = 0x10000, scoped, tag = 'input window, operand 8, single buffered']
    #allocation10 [shape = 's32[1]{0}', space=sflag, size = 0x4, scoped, tag = 'scoped memory for tpu_custom_call.1']
    #allocation11 [shape = 'u8[4096]{0}', space=vmem, size = 0x1000, scoped, tag = 'output window, operand 0, single buffered']
    %16 = vsyncpa [#allocation4], 0
    %17 = vsyncpa [#allocation7], 0
    %18 = vsyncpa [#allocation10], 0
    %19 = vsyncpa [#allocation5], 0
    // Predicated region
    $region2: #{tpu_custom_call.1} parent=1 // pred_check
      _
    $region3: #{tpu_custom_call.1} parent=1 // pred_check_branch
      %21 = sbr.rel (0) target = $region5
    $region4: #{tpu_custom_call.1} parent=1 // pred_region
      _
    $region5: #{tpu_custom_call.1} parent=1 // pred_fallthru
      _
    // Predicated region
    $region6: #{tpu_custom_call.1} parent=1 // pred_check
      _
    $region7: #{tpu_custom_call.1} parent=1 // pred_check_branch
      %23 = sbr.rel (0) target = $region9
    $region8: #{tpu_custom_call.1} parent=1 // pred_region
      %s25 = ssub.s32 64, 64
      %26 = vsyncadd [#allocation4], %s25
      %s28 = sshll.u32 [#allocation3], 4
      %s29 = int_to_ptr.vmem [resolvable:$true] %s28
      %31 = dma.hbm_to_vmem [thread:$0]  %s1, 64, %s29, [#allocation4]
    $region9: #{tpu_custom_call.1} parent=1 // pred_fallthru
      _
    // Predicated region
    $region10: #{tpu_custom_call.1} parent=1 // pred_check
      _
    $region11: #{tpu_custom_call.1} parent=1 // pred_check_branch
      %33 = sbr.rel (0) target = $region13
    $region12: #{tpu_custom_call.1} parent=1 // pred_region
      %s35 = ssub.s32 4096, 4096
      %36 = vsyncadd [#allocation7], %s35
      %s37 = sshll.u32 [#allocation6], 4
      %s38 = int_to_ptr.vmem [resolvable:$true] %s37
      %43 = dma.hbm_to_vmem [thread:$0]  %s2, 4096, %s38, [#allocation7], 256, 256, 16
    $region13: #{tpu_custom_call.1} parent=1 // pred_fallthru
      _
    // Predicated region
    $region14: #{tpu_custom_call.1} parent=1 // pred_check
      _
    $region15: #{tpu_custom_call.1} parent=1 // pred_check_branch
      %45 = sbr.rel (0) target = $region17
    $region16: #{tpu_custom_call.1} parent=1 // pred_region
      _
    $region17: #{tpu_custom_call.1} parent=1 // pred_fallthru
      _
    // Predicated region
    $region18: #{tpu_custom_call.1} parent=1 // pred_check
      _
    $region19: #{tpu_custom_call.1} parent=1 // pred_check_branch
      %47 = sbr.rel (0) target = $region21
    $region20: #{tpu_custom_call.1} parent=1 // pred_region
      _
    $region21: #{tpu_custom_call.1} parent=1 // pred_fallthru
      _
    // Predicated region
    $region22: #{tpu_custom_call.1} parent=1 // pred_check
      _
    $region23: #{tpu_custom_call.1} parent=1 // pred_check_branch
      %49 = sbr.rel (0) target = $region25
    $region24: #{tpu_custom_call.1} parent=1 // pred_region
      %s51 = ssub.s32 8192, 8192
      %52 = vsyncadd [#allocation7], %s51
      %s53 = sshll.u32 [#allocation8], 4
      %s54 = int_to_ptr.vmem [resolvable:$true] %s53
      %59 = dma.hbm_to_vmem [thread:$0]  %s5, 8192, %s54, [#allocation7], 128, 128, 8
    $region25: #{tpu_custom_call.1} parent=1 // pred_fallthru
      _
    // Predicated region
    $region26: #{tpu_custom_call.1} parent=1 // pred_check
      _
    $region27: #{tpu_custom_call.1} parent=1 // pred_check_branch
      %61 = sbr.rel (0) target = $region29
    $region28: #{tpu_custom_call.1} parent=1 // pred_region
      _
    $region29: #{tpu_custom_call.1} parent=1 // pred_fallthru
      _
    // Predicated region
    $region30: #{tpu_custom_call.1} parent=1 // pred_check
      _
    $region31: #{tpu_custom_call.1} parent=1 // pred_check_branch
      %63 = sbr.rel (0) target = $region33
    $region32: #{tpu_custom_call.1} parent=1 // pred_region
      _
    $region33: #{tpu_custom_call.1} parent=1 // pred_fallthru
      _
    // Predicated region
    $region34: #{tpu_custom_call.1} parent=1 // pred_check
      _
    $region35: #{tpu_custom_call.1} parent=1 // pred_check_branch
      %65 = sbr.rel (0) target = $region37
    $region36: #{tpu_custom_call.1} parent=1 // pred_region
      %s67 = ssub.s32 2048, 2048
      %68 = vsyncadd [#allocation10], %s67
      %s69 = sshll.u32 [#allocation9], 4
      %s70 = int_to_ptr.vmem [resolvable:$true] %s69
      %75 = dma.hbm_to_vmem [thread:$0]  %s8, 2048, %s70, [#allocation10], 64, 64, 4
    $region37: #{tpu_custom_call.1} parent=1 // pred_fallthru
      _
    // Predicated region
    $region38: #{tpu_custom_call.1} parent=1 // pred_check
      _
    $region39: #{tpu_custom_call.1} parent=1 // pred_check_branch
      %77 = sbr.rel (0) target = $region41
    $region40: #{tpu_custom_call.1} parent=1 // pred_region
      _
    $region41: #{tpu_custom_call.1} parent=1 // pred_fallthru
      _
    // Predicated region
    $region42: #{tpu_custom_call.1} parent=1 // pred_check
      _
    $region43: #{tpu_custom_call.1} parent=1 // pred_check_branch
      %79 = sbr.rel (0) target = $region45
    $region44: #{tpu_custom_call.1} parent=1 // pred_region
      %80 = dma.done [#allocation4], 64
    $region45: #{tpu_custom_call.1} parent=1 // pred_fallthru
      _
    // Predicated region
    $region46: #{tpu_custom_call.1} parent=1 // pred_check
      _
    $region47: #{tpu_custom_call.1} parent=1 // pred_check_branch
      %82 = sbr.rel (0) target = $region49
    $region48: #{tpu_custom_call.1} parent=1 // pred_region
      %83 = dma.done [#allocation7], 4096
    $region49: #{tpu_custom_call.1} parent=1 // pred_fallthru
      _
    // Predicated region
    $region50: #{tpu_custom_call.1} parent=1 // pred_check
      _
    $region51: #{tpu_custom_call.1} parent=1 // pred_check_branch
      %85 = sbr.rel (0) target = $region53
    $region52: #{tpu_custom_call.1} parent=1 // pred_region
      %86 = dma.done [#allocation7], 8192
    $region53: #{tpu_custom_call.1} parent=1 // pred_fallthru
      _
    // Predicated region
    $region54: #{tpu_custom_call.1} parent=1 // pred_check
      _
    $region55: #{tpu_custom_call.1} parent=1 // pred_check_branch
      %88 = sbr.rel (0) target = $region57
    $region56: #{tpu_custom_call.1} parent=1 // pred_region
      %89 = dma.done [#allocation10], 2048
    $region57: #{tpu_custom_call.1} parent=1 // pred_fallthru
      _
    %s91 = sld [smem:[#allocation2]]
    %v92 = vld [vmem:[#allocation3] sm:$0xf]
    %v93 = vld [vmem:[#allocation6] sm:$0xff]
    %v94 = vld [vmem:[#allocation6 + $0x8] sm:$0xff]
    %v95 = vld [vmem:[#allocation6 + $0x10] sm:$0xff]
    %v96 = vld [vmem:[#allocation6 + $0x18] sm:$0xff]
    %v97 = vld [vmem:[#allocation6 + $0x20] sm:$0xff]
    %v98 = vld [vmem:[#allocation6 + $0x28] sm:$0xff]
    %v99 = vld [vmem:[#allocation6 + $0x30] sm:$0xff]
    %v100 = vld [vmem:[#allocation6 + $0x38] sm:$0xff]
    %v101 = vld [vmem:[#allocation6 + $0x40] sm:$0xff]
    %v102 = vld [vmem:[#allocation6 + $0x48] sm:$0xff]
    %v103 = vld [vmem:[#allocation6 + $0x50] sm:$0xff]
    %v104 = vld [vmem:[#allocation6 + $0x58] sm:$0xff]
    %v105 = vld [vmem:[#allocation6 + $0x60] sm:$0xff]
    %v106 = vld [vmem:[#allocation6 + $0x68] sm:$0xff]
    %v107 = vld [vmem:[#allocation6 + $0x70] sm:$0xff]
    %v108 = vld [vmem:[#allocation6 + $0x78] sm:$0xff]
    %v109 = vld [vmem:[#allocation6 + $0x80] sm:$0xff]
    %v110 = vld [vmem:[#allocation6 + $0x88] sm:$0xff]
    %v111 = vld [vmem:[#allocation6 + $0x90] sm:$0xff]
    %v112 = vld [vmem:[#allocation6 + $0x98] sm:$0xff]
    %v113 = vld [vmem:[#allocation6 + $0xa0] sm:$0xff]
    %v114 = vld [vmem:[#allocation6 + $0xa8] sm:$0xff]
    %v115 = vld [vmem:[#allocation6 + $0xb0] sm:$0xff]
    %v116 = vld [vmem:[#allocation6 + $0xb8] sm:$0xff]
    %v117 = vld [vmem:[#allocation6 + $0xc0] sm:$0xff]
    %v118 = vld [vmem:[#allocation6 + $0xc8] sm:$0xff]
    %v119 = vld [vmem:[#allocation6 + $0xd0] sm:$0xff]
    %v120 = vld [vmem:[#allocation6 + $0xd8] sm:$0xff]
    %v121 = vld [vmem:[#allocation6 + $0xe0] sm:$0xff]
    %v122 = vld [vmem:[#allocation6 + $0xe8] sm:$0xff]
    %v123 = vld [vmem:[#allocation6 + $0xf0] sm:$0xff]
    %v124 = vld [vmem:[#allocation6 + $0xf8] sm:$0xff]
    %v157 = vunpack.c.l.b16 %v93
    %v158 = vunpack.c.h.b16 %v93
    %v159 = vunpack.c.l.b16 %v94
    %v160 = vunpack.c.h.b16 %v94
    %v161 = vunpack.c.l.b16 %v95
    %v162 = vunpack.c.h.b16 %v95
    %v163 = vunpack.c.l.b16 %v96
    %v164 = vunpack.c.h.b16 %v96
    %v165 = vunpack.c.l.b16 %v97
    %v166 = vunpack.c.h.b16 %v97
    %v167 = vunpack.c.l.b16 %v98
    %v168 = vunpack.c.h.b16 %v98
    %v169 = vunpack.c.l.b16 %v99
    %v170 = vunpack.c.h.b16 %v99
    %v171 = vunpack.c.l.b16 %v100
    %v172 = vunpack.c.h.b16 %v100
    %v173 = vunpack.c.l.b16 %v101
    %v174 = vunpack.c.h.b16 %v101
    %v175 = vunpack.c.l.b16 %v102
    %v176 = vunpack.c.h.b16 %v102
    %v177 = vunpack.c.l.b16 %v103
    %v178 = vunpack.c.h.b16 %v103
    %v179 = vunpack.c.l.b16 %v104
    %v180 = vunpack.c.h.b16 %v104
    %v181 = vunpack.c.l.b16 %v105
    %v182 = vunpack.c.h.b16 %v105
    %v183 = vunpack.c.l.b16 %v106
    %v184 = vunpack.c.h.b16 %v106
    %v185 = vunpack.c.l.b16 %v107
    %v186 = vunpack.c.h.b16 %v107
    %v187 = vunpack.c.l.b16 %v108
    %v188 = vunpack.c.h.b16 %v108
    %v189 = vunpack.c.l.b16 %v109
    %v190 = vunpack.c.h.b16 %v109
    %v191 = vunpack.c.l.b16 %v110
    %v192 = vunpack.c.h.b16 %v110
    %v193 = vunpack.c.l.b16 %v111
    %v194 = vunpack.c.h.b16 %v111
    %v195 = vunpack.c.l.b16 %v112
    %v196 = vunpack.c.h.b16 %v112
    %v197 = vunpack.c.l.b16 %v113
    %v198 = vunpack.c.h.b16 %v113
    %v199 = vunpack.c.l.b16 %v114
    %v200 = vunpack.c.h.b16 %v114
    %v201 = vunpack.c.l.b16 %v115
    %v202 = vunpack.c.h.b16 %v115
    %v203 = vunpack.c.l.b16 %v116
    %v204 = vunpack.c.h.b16 %v116
    %v205 = vunpack.c.l.b16 %v117
    %v206 = vunpack.c.h.b16 %v117
    %v207 = vunpack.c.l.b16 %v118
    %v208 = vunpack.c.h.b16 %v118
    %v209 = vunpack.c.l.b16 %v119
    %v210 = vunpack.c.h.b16 %v119
    %v211 = vunpack.c.l.b16 %v120
    %v212 = vunpack.c.h.b16 %v120
    %v213 = vunpack.c.l.b16 %v121
    %v214 = vunpack.c.h.b16 %v121
    %v215 = vunpack.c.l.b16 %v122
    %v216 = vunpack.c.h.b16 %v122
    %v217 = vunpack.c.l.b16 %v123
    %v218 = vunpack.c.h.b16 %v123
    %v219 = vunpack.c.l.b16 %v124
    %v220 = vunpack.c.h.b16 %v124
    %v221 = vpack.c.b16 %v161, %v157
    %v222 = vpack.c.b16 %v162, %v158
    %v223 = vpack.c.b16 %v163, %v159
    %v224 = vpack.c.b16 %v164, %v160
    %v225 = vpack.c.b16 %v169, %v165
    %v226 = vpack.c.b16 %v170, %v166
    %v227 = vpack.c.b16 %v171, %v167
    %v228 = vpack.c.b16 %v172, %v168
    %v229 = vpack.c.b16 %v177, %v173
    %v230 = vpack.c.b16 %v178, %v174
    %v231 = vpack.c.b16 %v179, %v175
    %v232 = vpack.c.b16 %v180, %v176
    %v233 = vpack.c.b16 %v185, %v181
    %v234 = vpack.c.b16 %v186, %v182
    %v235 = vpack.c.b16 %v187, %v183
    %v236 = vpack.c.b16 %v188, %v184
    %v237 = vpack.c.b16 %v193, %v189
    %v238 = vpack.c.b16 %v194, %v190
    %v239 = vpack.c.b16 %v195, %v191
    %v240 = vpack.c.b16 %v196, %v192
    %v241 = vpack.c.b16 %v201, %v197
    %v242 = vpack.c.b16 %v202, %v198
    %v243 = vpack.c.b16 %v203, %v199
    %v244 = vpack.c.b16 %v204, %v200
    %v245 = vpack.c.b16 %v209, %v205
    %v246 = vpack.c.b16 %v210, %v206
    %v247 = vpack.c.b16 %v211, %v207
    %v248 = vpack.c.b16 %v212, %v208
    %v249 = vpack.c.b16 %v217, %v213
    %v250 = vpack.c.b16 %v218, %v214
    %v251 = vpack.c.b16 %v219, %v215
    %v252 = vpack.c.b16 %v220, %v216
    %285 = vmatprep.subr.bf16.mxu0 %v222
    %286 = vmatpush1.bf16.msra.mxu0 %v221
    %287 = vmatprep.subr.bf16.mxu0 %v226
    %288 = vmatpush1.bf16.msra.mxu0 %v225
    %289 = vmatprep.subr.bf16.mxu0 %v230
    %290 = vmatpush1.bf16.msra.mxu0 %v229
    %291 = vmatprep.subr.bf16.mxu0 %v234
    %292 = vmatpush1.bf16.msra.mxu0 %v233
    %293 = vmatprep.subr.bf16.mxu0 %v238
    %294 = vmatpush1.bf16.msra.mxu0 %v237
    %295 = vmatprep.subr.bf16.mxu0 %v242
    %296 = vmatpush1.bf16.msra.mxu0 %v241
    %297 = vmatprep.subr.bf16.mxu0 %v246
    %298 = vmatpush1.bf16.msra.mxu0 %v245
    %299 = vmatprep.subr.bf16.mxu0 %v250
    %300 = vmatpush1.bf16.msra.mxu0 %v249
    %301 = vmatprep.subr.bf16.mxu0 0
    %302 = vmatpush1.bf16.msra.mxu0 0
    %303 = vmatprep.subr.bf16.mxu0 0
    %304 = vmatpush1.bf16.msra.mxu0 0
    %305 = vmatprep.subr.bf16.mxu0 0
    %306 = vmatpush1.bf16.msra.mxu0 0
    %307 = vmatprep.subr.bf16.mxu0 0
    %308 = vmatpush1.bf16.msra.mxu0 0
    %309 = vmatprep.subr.bf16.mxu0 0
    %310 = vmatpush1.bf16.msra.mxu0 0
    %311 = vmatprep.subr.bf16.mxu0 0
    %312 = vmatpush1.bf16.msra.mxu0 0
    %313 = vmatprep.subr.bf16.mxu0 0
    %314 = vmatpush1.bf16.msra.mxu0 0
    %315 = vmatprep.subr.bf16.mxu0 0
    %316 = vmatpush1.bf16.msra.mxu0 0
    %317 = vmatprep.mubr.bf16.mxu0 0
    %318 = vmatmul.mubr.bf16.gmra.mrb[0].mxu0 %v92
    %v319 = vpop.f32.mrb[0].mxu0
    %v320 = vadd.f32 0.0, %v319
    %v321 = vpop.f32.mrb[0].mxu0
    %v322 = vadd.f32 0.0, %v321
    %v323 = vpop.f32.mrb[0].mxu0
    %v324 = vpop.f32.mrb[0].mxu0
    %325 = vdwg.mxu0
    %326 = vmatprep.subr.bf16.mxu0 %v224
    %327 = vmatpush1.bf16.msra.mxu0 %v223
    %328 = vmatprep.subr.bf16.mxu0 %v228
    %329 = vmatpush1.bf16.msra.mxu0 %v227
    %330 = vmatprep.subr.bf16.mxu0 %v232
    %331 = vmatpush1.bf16.msra.mxu0 %v231
    %332 = vmatprep.subr.bf16.mxu0 %v236
    %333 = vmatpush1.bf16.msra.mxu0 %v235
    %334 = vmatprep.subr.bf16.mxu0 %v240
    %335 = vmatpush1.bf16.msra.mxu0 %v239
    %336 = vmatprep.subr.bf16.mxu0 %v244
    %337 = vmatpush1.bf16.msra.mxu0 %v243
    %338 = vmatprep.subr.bf16.mxu0 %v248
    %339 = vmatpush1.bf16.msra.mxu0 %v247
    %340 = vmatprep.subr.bf16.mxu0 %v252
    %341 = vmatpush1.bf16.msra.mxu0 %v251
    %342 = vmatprep.subr.bf16.mxu0 0
    %343 = vmatpush1.bf16.msra.mxu0 0
    %344 = vmatprep.subr.bf16.mxu0 0
    %345 = vmatpush1.bf16.msra.mxu0 0
    %346 = vmatprep.subr.bf16.mxu0 0
    %347 = vmatpush1.bf16.msra.mxu0 0
    %348 = vmatprep.subr.bf16.mxu0 0
    %349 = vmatpush1.bf16.msra.mxu0 0
    %350 = vmatprep.subr.bf16.mxu0 0
    %351 = vmatpush1.bf16.msra.mxu0 0
    %352 = vmatprep.subr.bf16.mxu0 0
    %353 = vmatpush1.bf16.msra.mxu0 0
    %354 = vmatprep.subr.bf16.mxu0 0
    %355 = vmatpush1.bf16.msra.mxu0 0
    %356 = vmatprep.subr.bf16.mxu0 0
    %357 = vmatpush1.bf16.msra.mxu0 0
    %358 = vmatprep.mubr.bf16.mxu0 0
    %359 = vmatmul.mubr.bf16.gmra.mrb[0].mxu0 %v92
    %v360 = vpop.f32.mrb[0].mxu0
    %v361 = vadd.f32 0.0, %v360
    %v362 = vpop.f32.mrb[0].mxu0
    %v363 = vadd.f32 0.0, %v362
    %v364 = vpop.f32.mrb[0].mxu0
    %v365 = vpop.f32.mrb[0].mxu0
    %366 = vdwg.mxu0
    %v367 = vld [vmem:[%s3] sm:$0xf]
    %v368 = vld [vmem:[%s4] sm:$0xf]
    %v369 = vrot.slane %v320, 4
    %v370 = vadd.f32 %v320, %v369
    %v371 = vrot.slane %v370, 2
    %v372 = vadd.f32 %v370, %v371
    %v373 = vrot.slane %v372, 1
    %v374 = vadd.f32 %v372, %v373
    %v375 = vrot.slane %v322, 4
    %v376 = vadd.f32 %v322, %v375
    %v377 = vrot.slane %v376, 2
    %v378 = vadd.f32 %v376, %v377
    %v379 = vrot.slane %v378, 1
    %v380 = vadd.f32 %v378, %v379
    %v381 = vrot.slane %v361, 4
    %v382 = vadd.f32 %v361, %v381
    %v383 = vrot.slane %v382, 2
    %v384 = vadd.f32 %v382, %v383
    %v385 = vrot.slane %v384, 1
    %v386 = vadd.f32 %v384, %v385
    %v387 = vrot.slane %v363, 4
    %v388 = vadd.f32 %v363, %v387
    %v389 = vrot.slane %v388, 2
    %v390 = vadd.f32 %v388, %v389
    %v391 = vrot.slane %v390, 1
    %v392 = vadd.f32 %v390, %v391
    %v393 = vmul.f32 %v320, %v320
    %v394 = vmul.f32 %v322, %v322
    %v395 = vmul.f32 %v361, %v361
    %v396 = vmul.f32 %v363, %v363
    %v397 = vrot.slane %v393, 4
    %v398 = vadd.f32 %v393, %v397
    %v399 = vrot.slane %v398, 2
    %v400 = vadd.f32 %v398, %v399
    %v401 = vrot.slane %v400, 1
    %v402 = vadd.f32 %v400, %v401
    %v403 = vrot.slane %v394, 4
    %v404 = vadd.f32 %v394, %v403
    %v405 = vrot.slane %v404, 2
    %v406 = vadd.f32 %v404, %v405
    %v407 = vrot.slane %v406, 1
    %v408 = vadd.f32 %v406, %v407
    %v409 = vrot.slane %v395, 4
    %v410 = vadd.f32 %v395, %v409
    %v411 = vrot.slane %v410, 2
    %v412 = vadd.f32 %v410, %v411
    %v413 = vrot.slane %v412, 1
    %v414 = vadd.f32 %v412, %v413
    %v415 = vrot.slane %v396, 4
    %v416 = vadd.f32 %v396, %v415
    %v417 = vrot.slane %v416, 2
    %v418 = vadd.f32 %v416, %v417
    %v419 = vrot.slane %v418, 1
    %v420 = vadd.f32 %v418, %v419
    %v421 = vstv %s91
    %v422 = vmul.f32 %v374, %v421
    %v423 = vmul.f32 %v380, %v421
    %v424 = vmul.f32 %v386, %v421
    %v425 = vmul.f32 %v392, %v421
    %v426 = vmul.f32 %v402, %v421
    %v427 = vmul.f32 %v408, %v421
    %v428 = vmul.f32 %v414, %v421
    %v429 = vmul.f32 %v420, %v421
    %v430 = vmul.f32 %v422, %v422
    %v431 = vmul.f32 %v423, %v423
    %v432 = vmul.f32 %v424, %v424
    %v433 = vmul.f32 %v425, %v425
    %v434 = vsub.f32 %v426, %v430
    %v435 = vsub.f32 %v427, %v431
    %v436 = vsub.f32 %v428, %v432
    %v437 = vsub.f32 %v429, %v433
    %v438 = vmax.f32 %v434, 0.0
    %v439 = vmax.f32 %v435, 0.0
    %v440 = vmax.f32 %v436, 0.0
    %v441 = vmax.f32 %v437, 0.0
    %v442 = vadd.f32 %v438, 1e-05
    %v443 = vadd.f32 %v439, 1e-05
    %v444 = vadd.f32 %v440, 1e-05
    %v445 = vadd.f32 %v441, 1e-05
    %v446 = vrsqrt.pop %v442
    %v447 = vrsqrt.pop %v443
    %v448 = vrsqrt.pop %v444
    %v449 = vrsqrt.pop %v445
    %v454 = vcombine.low %v446, %v447
    %v455 = vcombine.low %v448, %v449
    %v457 = vunpack.c.l.s4 1966171168
    %v458 = vunpack.c.0.s8 %v457
    %v459 = vlaneseq
    %v460 = vshrl.u32 %v459, 7
    %v461 = vsub.s32 %v458, %v460
    %v462 = vrot.slane %v454, %v461
    %v464 = vunpack.c.l.s4 1966171168
    %v465 = vunpack.c.0.s8 %v464
    %v466 = vlaneseq
    %v467 = vshrl.u32 %v466, 7
    %v468 = vsub.s32 %v465, %v467
    %v469 = vrot.slane %v455, %v468
    %v470 = vcombine.low %v462, %v469
    %v472 = vunpack.c.l.s4 1966171168
    %v473 = vunpack.c.0.s8 %v472
    %v474 = vlaneseq
    %v475 = vshrl.u32 %v474, 7
    %v476 = vsub.s32 %v473, %v475
    %v477 = vrot.slane %v470, %v476
    %v479 = vmul.f32 %v367, %v477
    %v481 = vlaneseq
    %v482 = vshrl.u32 %v481, 7
    %v483 = vsub.s32 0, %v482
    %v484 = vrot.slane %v479, %v483
    %v485 = vlaneseq
    %v486 = vshrl.u32 %v485, 7
    %v487 = vsub.s32 1, %v486
    %v488 = vrot.slane %v479, %v487
    %v489 = vlaneseq
    %v490 = vshrl.u32 %v489, 7
    %v491 = vsub.s32 2, %v490
    %v492 = vrot.slane %v479, %v491
    %v493 = vlaneseq
    %v494 = vshrl.u32 %v493, 7
    %v495 = vsub.s32 3, %v494
    %v496 = vrot.slane %v479, %v495
    %v501 = vmul.f32 %v422, %v484
    %v502 = vmul.f32 %v423, %v488
    %v503 = vmul.f32 %v424, %v492
    %v504 = vmul.f32 %v425, %v496
    %v509 = vcombine.low %v501, %v502
    %v510 = vcombine.low %v503, %v504
    %v512 = vunpack.c.l.s4 1966171168
    %v513 = vunpack.c.0.s8 %v512
    %v514 = vlaneseq
    %v515 = vshrl.u32 %v514, 7
    %v516 = vsub.s32 %v513, %v515
    %v517 = vrot.slane %v509, %v516
    %v519 = vunpack.c.l.s4 1966171168
    %v520 = vunpack.c.0.s8 %v519
    %v521 = vlaneseq
    %v522 = vshrl.u32 %v521, 7
    %v523 = vsub.s32 %v520, %v522
    %v524 = vrot.slane %v510, %v523
    %v525 = vcombine.low %v517, %v524
    %v527 = vunpack.c.l.s4 1966171168
    %v528 = vunpack.c.0.s8 %v527
    %v529 = vlaneseq
    %v530 = vshrl.u32 %v529, 7
    %v531 = vsub.s32 %v528, %v530
    %v532 = vrot.slane %v525, %v531
    %v534 = vsub.f32 %v368, %v532
    %v535 = vmul.f32 %v320, %v484
    %v536 = vmul.f32 %v322, %v488
    %v537 = vmul.f32 %v361, %v492
    %v538 = vmul.f32 %v363, %v496
    %v540 = vlaneseq
    %v541 = vshrl.u32 %v540, 7
    %v542 = vsub.s32 0, %v541
    %v543 = vrot.slane %v534, %v542
    %v544 = vlaneseq
    %v545 = vshrl.u32 %v544, 7
    %v546 = vsub.s32 1, %v545
    %v547 = vrot.slane %v534, %v546
    %v548 = vlaneseq
    %v549 = vshrl.u32 %v548, 7
    %v550 = vsub.s32 2, %v549
    %v551 = vrot.slane %v534, %v550
    %v552 = vlaneseq
    %v553 = vshrl.u32 %v552, 7
    %v554 = vsub.s32 3, %v553
    %v555 = vrot.slane %v534, %v554
    %v560 = vadd.f32 %v535, %v543
    %v561 = vadd.f32 %v536, %v547
    %v562 = vadd.f32 %v537, %v551
    %v563 = vadd.f32 %v538, %v555
    %v564 = vmax.f32 %v560, 0.0
    %v565 = vmax.f32 %v561, 0.0
    %v566 = vmax.f32 %v562, 0.0
    %v567 = vmax.f32 %v563, 0.0
    %v568 = vpack.c.bf16 %v564, %v564
    %v569 = vpack.c.bf16 %v565, %v565
    %v570 = vpack.c.bf16 %v566, %v566
    %v571 = vpack.c.bf16 %v567, %v567
    %v572 = vld [vmem:[#allocation8] sm:$0xff]
    %v573 = vld [vmem:[#allocation8 + $0x8] sm:$0xff]
    %v574 = vld [vmem:[#allocation8 + $0x10] sm:$0xff]
    %v575 = vld [vmem:[#allocation8 + $0x18] sm:$0xff]
    %v576 = vld [vmem:[#allocation8 + $0x20] sm:$0xff]
    %v577 = vld [vmem:[#allocation8 + $0x28] sm:$0xff]
    %v578 = vld [vmem:[#allocation8 + $0x30] sm:$0xff]
    %v579 = vld [vmem:[#allocation8 + $0x38] sm:$0xff]
    %v580 = vld [vmem:[#allocation8 + $0x40] sm:$0xff]
    %v581 = vld [vmem:[#allocation8 + $0x48] sm:$0xff]
    %v582 = vld [vmem:[#allocation8 + $0x50] sm:$0xff]
    %v583 = vld [vmem:[#allocation8 + $0x58] sm:$0xff]
    %v584 = vld [vmem:[#allocation8 + $0x60] sm:$0xff]
    %v585 = vld [vmem:[#allocation8 + $0x68] sm:$0xff]
    %v586 = vld [vmem:[#allocation8 + $0x70] sm:$0xff]
    %v587 = vld [vmem:[#allocation8 + $0x78] sm:$0xff]
    %v588 = vld [vmem:[#allocation8 + $0x80] sm:$0xff]
    %v589 = vld [vmem:[#allocation8 + $0x88] sm:$0xff]
    %v590 = vld [vmem:[#allocation8 + $0x90] sm:$0xff]
    %v591 = vld [vmem:[#allocation8 + $0x98] sm:$0xff]
    %v592 = vld [vmem:[#allocation8 + $0xa0] sm:$0xff]
    %v593 = vld [vmem:[#allocation8 + $0xa8] sm:$0xff]
    %v594 = vld [vmem:[#allocation8 + $0xb0] sm:$0xff]
    %v595 = vld [vmem:[#allocation8 + $0xb8] sm:$0xff]
    %v596 = vld [vmem:[#allocation8 + $0xc0] sm:$0xff]
    %v597 = vld [vmem:[#allocation8 + $0xc8] sm:$0xff]
    %v598 = vld [vmem:[#allocation8 + $0xd0] sm:$0xff]
    %v599 = vld [vmem:[#allocation8 + $0xd8] sm:$0xff]
    %v600 = vld [vmem:[#allocation8 + $0xe0] sm:$0xff]
    %v601 = vld [vmem:[#allocation8 + $0xe8] sm:$0xff]
    %v602 = vld [vmem:[#allocation8 + $0xf0] sm:$0xff]
    %v603 = vld [vmem:[#allocation8 + $0xf8] sm:$0xff]
    %v604 = vld [vmem:[#allocation8 + $0x100] sm:$0xff]
    %v605 = vld [vmem:[#allocation8 + $0x108] sm:$0xff]
    %v606 = vld [vmem:[#allocation8 + $0x110] sm:$0xff]
    %v607 = vld [vmem:[#allocation8 + $0x118] sm:$0xff]
    %v608 = vld [vmem:[#allocation8 + $0x120] sm:$0xff]
    %v609 = vld [vmem:[#allocation8 + $0x128] sm:$0xff]
    %v610 = vld [vmem:[#allocation8 + $0x130] sm:$0xff]
    %v611 = vld [vmem:[#allocation8 + $0x138] sm:$0xff]
    %v612 = vld [vmem:[#allocation8 + $0x140] sm:$0xff]
    %v613 = vld [vmem:[#allocation8 + $0x148] sm:$0xff]
    %v614 = vld [vmem:[#allocation8 + $0x150] sm:$0xff]
    %v615 = vld [vmem:[#allocation8 + $0x158] sm:$0xff]
    %v616 = vld [vmem:[#allocation8 + $0x160] sm:$0xff]
    %v617 = vld [vmem:[#allocation8 + $0x168] sm:$0xff]
    %v618 = vld [vmem:[#allocation8 + $0x170] sm:$0xff]
    %v619 = vld [vmem:[#allocation8 + $0x178] sm:$0xff]
    %v620 = vld [vmem:[#allocation8 + $0x180] sm:$0xff]
    %v621 = vld [vmem:[#allocation8 + $0x188] sm:$0xff]
    %v622 = vld [vmem:[#allocation8 + $0x190] sm:$0xff]
    %v623 = vld [vmem:[#allocation8 + $0x198] sm:$0xff]
    %v624 = vld [vmem:[#allocation8 + $0x1a0] sm:$0xff]
    %v625 = vld [vmem:[#allocation8 + $0x1a8] sm:$0xff]
    %v626 = vld [vmem:[#allocation8 + $0x1b0] sm:$0xff]
    %v627 = vld [vmem:[#allocation8 + $0x1b8] sm:$0xff]
    %v628 = vld [vmem:[#allocation8 + $0x1c0] sm:$0xff]
    %v629 = vld [vmem:[#allocation8 + $0x1c8] sm:$0xff]
    %v630 = vld [vmem:[#allocation8 + $0x1d0] sm:$0xff]
    %v631 = vld [vmem:[#allocation8 + $0x1d8] sm:$0xff]
    %v632 = vld [vmem:[#allocation8 + $0x1e0] sm:$0xff]
    %v633 = vld [vmem:[#allocation8 + $0x1e8] sm:$0xff]
    %v634 = vld [vmem:[#allocation8 + $0x1f0] sm:$0xff]
    %v635 = vld [vmem:[#allocation8 + $0x1f8] sm:$0xff]
    %v700 = vunpack.c.l.b16 %v572
    %v701 = vunpack.c.h.b16 %v572
    %v702 = vunpack.c.l.b16 %v573
    %v703 = vunpack.c.h.b16 %v573
    %v704 = vunpack.c.l.b16 %v574
    %v705 = vunpack.c.h.b16 %v574
    %v706 = vunpack.c.l.b16 %v575
    %v707 = vunpack.c.h.b16 %v575
    %v708 = vunpack.c.l.b16 %v576
    %v709 = vunpack.c.h.b16 %v576
    %v710 = vunpack.c.l.b16 %v577
    %v711 = vunpack.c.h.b16 %v577
    %v712 = vunpack.c.l.b16 %v578
    %v713 = vunpack.c.h.b16 %v578
    %v714 = vunpack.c.l.b16 %v579
    %v715 = vunpack.c.h.b16 %v579
    %v716 = vunpack.c.l.b16 %v580
    %v717 = vunpack.c.h.b16 %v580
    %v718 = vunpack.c.l.b16 %v581
    %v719 = vunpack.c.h.b16 %v581
    %v720 = vunpack.c.l.b16 %v582
    %v721 = vunpack.c.h.b16 %v582
    %v722 = vunpack.c.l.b16 %v583
    %v723 = vunpack.c.h.b16 %v583
    %v724 = vunpack.c.l.b16 %v584
    %v725 = vunpack.c.h.b16 %v584
    %v726 = vunpack.c.l.b16 %v585
    %v727 = vunpack.c.h.b16 %v585
    %v728 = vunpack.c.l.b16 %v586
    %v729 = vunpack.c.h.b16 %v586
    %v730 = vunpack.c.l.b16 %v587
    %v731 = vunpack.c.h.b16 %v587
    %v732 = vunpack.c.l.b16 %v588
    %v733 = vunpack.c.h.b16 %v588
    %v734 = vunpack.c.l.b16 %v589
    %v735 = vunpack.c.h.b16 %v589
    %v736 = vunpack.c.l.b16 %v590
    %v737 = vunpack.c.h.b16 %v590
    %v738 = vunpack.c.l.b16 %v591
    %v739 = vunpack.c.h.b16 %v591
    %v740 = vunpack.c.l.b16 %v592
    %v741 = vunpack.c.h.b16 %v592
    %v742 = vunpack.c.l.b16 %v593
    %v743 = vunpack.c.h.b16 %v593
    %v744 = vunpack.c.l.b16 %v594
    %v745 = vunpack.c.h.b16 %v594
    %v746 = vunpack.c.l.b16 %v595
    %v747 = vunpack.c.h.b16 %v595
    %v748 = vunpack.c.l.b16 %v596
    %v749 = vunpack.c.h.b16 %v596
    %v750 = vunpack.c.l.b16 %v597
    %v751 = vunpack.c.h.b16 %v597
    %v752 = vunpack.c.l.b16 %v598
    %v753 = vunpack.c.h.b16 %v598
    %v754 = vunpack.c.l.b16 %v599
    %v755 = vunpack.c.h.b16 %v599
    %v756 = vunpack.c.l.b16 %v600
    %v757 = vunpack.c.h.b16 %v600
    %v758 = vunpack.c.l.b16 %v601
    %v759 = vunpack.c.h.b16 %v601
    %v760 = vunpack.c.l.b16 %v602
    %v761 = vunpack.c.h.b16 %v602
    %v762 = vunpack.c.l.b16 %v603
    %v763 = vunpack.c.h.b16 %v603
    %v764 = vunpack.c.l.b16 %v604
    %v765 = vunpack.c.h.b16 %v604
    %v766 = vunpack.c.l.b16 %v605
    %v767 = vunpack.c.h.b16 %v605
    %v768 = vunpack.c.l.b16 %v606
    %v769 = vunpack.c.h.b16 %v606
    %v770 = vunpack.c.l.b16 %v607
    %v771 = vunpack.c.h.b16 %v607
    %v772 = vunpack.c.l.b16 %v608
    %v773 = vunpack.c.h.b16 %v608
    %v774 = vunpack.c.l.b16 %v609
    %v775 = vunpack.c.h.b16 %v609
    %v776 = vunpack.c.l.b16 %v610
    %v777 = vunpack.c.h.b16 %v610
    %v778 = vunpack.c.l.b16 %v611
    %v779 = vunpack.c.h.b16 %v611
    %v780 = vunpack.c.l.b16 %v612
    %v781 = vunpack.c.h.b16 %v612
    %v782 = vunpack.c.l.b16 %v613
    %v783 = vunpack.c.h.b16 %v613
    %v784 = vunpack.c.l.b16 %v614
    %v785 = vunpack.c.h.b16 %v614
    %v786 = vunpack.c.l.b16 %v615
    %v787 = vunpack.c.h.b16 %v615
    %v788 = vunpack.c.l.b16 %v616
    %v789 = vunpack.c.h.b16 %v616
    %v790 = vunpack.c.l.b16 %v617
    %v791 = vunpack.c.h.b16 %v617
    %v792 = vunpack.c.l.b16 %v618
    %v793 = vunpack.c.h.b16 %v618
    %v794 = vunpack.c.l.b16 %v619
    %v795 = vunpack.c.h.b16 %v619
    %v796 = vunpack.c.l.b16 %v620
    %v797 = vunpack.c.h.b16 %v620
    %v798 = vunpack.c.l.b16 %v621
    %v799 = vunpack.c.h.b16 %v621
    %v800 = vunpack.c.l.b16 %v622
    %v801 = vunpack.c.h.b16 %v622
    %v802 = vunpack.c.l.b16 %v623
    %v803 = vunpack.c.h.b16 %v623
    %v804 = vunpack.c.l.b16 %v624
    %v805 = vunpack.c.h.b16 %v624
    %v806 = vunpack.c.l.b16 %v625
    %v807 = vunpack.c.h.b16 %v625
    %v808 = vunpack.c.l.b16 %v626
    %v809 = vunpack.c.h.b16 %v626
    %v810 = vunpack.c.l.b16 %v627
    %v811 = vunpack.c.h.b16 %v627
    %v812 = vunpack.c.l.b16 %v628
    %v813 = vunpack.c.h.b16 %v628
    %v814 = vunpack.c.l.b16 %v629
    %v815 = vunpack.c.h.b16 %v629
    %v816 = vunpack.c.l.b16 %v630
    %v817 = vunpack.c.h.b16 %v630
    %v818 = vunpack.c.l.b16 %v631
    %v819 = vunpack.c.h.b16 %v631
    %v820 = vunpack.c.l.b16 %v632
    %v821 = vunpack.c.h.b16 %v632
    %v822 = vunpack.c.l.b16 %v633
    %v823 = vunpack.c.h.b16 %v633
    %v824 = vunpack.c.l.b16 %v634
    %v825 = vunpack.c.h.b16 %v634
    %v826 = vunpack.c.l.b16 %v635
    %v827 = vunpack.c.h.b16 %v635
    %v828 = vpack.c.b16 %v702, %v700
    %v829 = vpack.c.b16 %v703, %v701
    %v830 = vpack.c.b16 %v706, %v704
    %v831 = vpack.c.b16 %v707, %v705
    %v832 = vpack.c.b16 %v710, %v708
    %v833 = vpack.c.b16 %v711, %v709
    %v834 = vpack.c.b16 %v714, %v712
    %v835 = vpack.c.b16 %v715, %v713
    %v836 = vpack.c.b16 %v718, %v716
    %v837 = vpack.c.b16 %v719, %v717
    %v838 = vpack.c.b16 %v722, %v720
    %v839 = vpack.c.b16 %v723, %v721
    %v840 = vpack.c.b16 %v726, %v724
    %v841 = vpack.c.b16 %v727, %v725
    %v842 = vpack.c.b16 %v730, %v728
    %v843 = vpack.c.b16 %v731, %v729
    %v844 = vpack.c.b16 %v734, %v732
    %v845 = vpack.c.b16 %v735, %v733
    %v846 = vpack.c.b16 %v738, %v736
    %v847 = vpack.c.b16 %v739, %v737
    %v848 = vpack.c.b16 %v742, %v740
    %v849 = vpack.c.b16 %v743, %v741
    %v850 = vpack.c.b16 %v746, %v744
    %v851 = vpack.c.b16 %v747, %v745
    %v852 = vpack.c.b16 %v750, %v748
    %v853 = vpack.c.b16 %v751, %v749
    %v854 = vpack.c.b16 %v754, %v752
    %v855 = vpack.c.b16 %v755, %v753
    %v856 = vpack.c.b16 %v758, %v756
    %v857 = vpack.c.b16 %v759, %v757
    %v858 = vpack.c.b16 %v762, %v760
    %v859 = vpack.c.b16 %v763, %v761
    %v860 = vpack.c.b16 %v766, %v764
    %v861 = vpack.c.b16 %v767, %v765
    %v862 = vpack.c.b16 %v770, %v768
    %v863 = vpack.c.b16 %v771, %v769
    %v864 = vpack.c.b16 %v774, %v772
    %v865 = vpack.c.b16 %v775, %v773
    %v866 = vpack.c.b16 %v778, %v776
    %v867 = vpack.c.b16 %v779, %v777
    %v868 = vpack.c.b16 %v782, %v780
    %v869 = vpack.c.b16 %v783, %v781
    %v870 = vpack.c.b16 %v786, %v784
    %v871 = vpack.c.b16 %v787, %v785
    %v872 = vpack.c.b16 %v790, %v788
    %v873 = vpack.c.b16 %v791, %v789
    %v874 = vpack.c.b16 %v794, %v792
    %v875 = vpack.c.b16 %v795, %v793
    %v876 = vpack.c.b16 %v798, %v796
    %v877 = vpack.c.b16 %v799, %v797
    %v878 = vpack.c.b16 %v802, %v800
    %v879 = vpack.c.b16 %v803, %v801
    %v880 = vpack.c.b16 %v806, %v804
    %v881 = vpack.c.b16 %v807, %v805
    %v882 = vpack.c.b16 %v810, %v808
    %v883 = vpack.c.b16 %v811, %v809
    %v884 = vpack.c.b16 %v814, %v812
    %v885 = vpack.c.b16 %v815, %v813
    %v886 = vpack.c.b16 %v818, %v816
    %v887 = vpack.c.b16 %v819, %v817
    %v888 = vpack.c.b16 %v822, %v820
    %v889 = vpack.c.b16 %v823, %v821
    %v890 = vpack.c.b16 %v826, %v824
    %v891 = vpack.c.b16 %v827, %v825
    %956 = vmatprep.subr.bf16.mxu0 %v829
    %957 = vmatpush1.bf16.msra.mxu0 %v828
    %958 = vmatprep.subr.bf16.mxu0 %v831
    %959 = vmatpush1.bf16.msra.mxu0 %v830
    %960 = vmatprep.subr.bf16.mxu0 %v833
    %961 = vmatpush1.bf16.msra.mxu0 %v832
    %962 = vmatprep.subr.bf16.mxu0 %v835
    %963 = vmatpush1.bf16.msra.mxu0 %v834
    %964 = vmatprep.subr.bf16.mxu0 %v837
    %965 = vmatpush1.bf16.msra.mxu0 %v836
    %966 = vmatprep.subr.bf16.mxu0 %v839
    %967 = vmatpush1.bf16.msra.mxu0 %v838
    %968 = vmatprep.subr.bf16.mxu0 %v841
    %969 = vmatpush1.bf16.msra.mxu0 %v840
    %970 = vmatprep.subr.bf16.mxu0 %v843
    %971 = vmatpush1.bf16.msra.mxu0 %v842
    %972 = vmatprep.subr.bf16.mxu0 %v845
    %973 = vmatpush1.bf16.msra.mxu0 %v844
    %974 = vmatprep.subr.bf16.mxu0 %v847
    %975 = vmatpush1.bf16.msra.mxu0 %v846
    %976 = vmatprep.subr.bf16.mxu0 %v849
    %977 = vmatpush1.bf16.msra.mxu0 %v848
    %978 = vmatprep.subr.bf16.mxu0 %v851
    %979 = vmatpush1.bf16.msra.mxu0 %v850
    %980 = vmatprep.subr.bf16.mxu0 %v853
    %981 = vmatpush1.bf16.msra.mxu0 %v852
    %982 = vmatprep.subr.bf16.mxu0 %v855
    %983 = vmatpush1.bf16.msra.mxu0 %v854
    %984 = vmatprep.subr.bf16.mxu0 %v857
    %985 = vmatpush1.bf16.msra.mxu0 %v856
    %986 = vmatprep.subr.bf16.mxu0 %v859
    %987 = vmatpush1.bf16.msra.mxu0 %v858
    %988 = vmatprep.mubr.bf16.mxu0 %v569
    %989 = vmatmul.mubr.bf16.gmra.mrb[0].mxu0 %v568
    %v990 = vpop.f32.mrb[0].mxu0
    %v991 = vadd.f32 0.0, %v990
    %v992 = vpop.f32.mrb[0].mxu0
    %v993 = vadd.f32 0.0, %v992
    %v994 = vpop.f32.mrb[0].mxu0
    %v995 = vpop.f32.mrb[0].mxu0
    %996 = vdwg.mxu0
    %997 = vmatprep.subr.bf16.mxu0 %v861
    %998 = vmatpush1.bf16.msra.mxu0 %v860
    %999 = vmatprep.subr.bf16.mxu0 %v863
    %1000 = vmatpush1.bf16.msra.mxu0 %v862
    %1001 = vmatprep.subr.bf16.mxu0 %v865
    %1002 = vmatpush1.bf16.msra.mxu0 %v864
    %1003 = vmatprep.subr.bf16.mxu0 %v867
    %1004 = vmatpush1.bf16.msra.mxu0 %v866
    %1005 = vmatprep.subr.bf16.mxu0 %v869
    %1006 = vmatpush1.bf16.msra.mxu0 %v868
    %1007 = vmatprep.subr.bf16.mxu0 %v871
    %1008 = vmatpush1.bf16.msra.mxu0 %v870
    %1009 = vmatprep.subr.bf16.mxu0 %v873
    %1010 = vmatpush1.bf16.msra.mxu0 %v872
    %1011 = vmatprep.subr.bf16.mxu0 %v875
    %1012 = vmatpush1.bf16.msra.mxu0 %v874
    %1013 = vmatprep.subr.bf16.mxu0 %v877
    %1014 = vmatpush1.bf16.msra.mxu0 %v876
    %1015 = vmatprep.subr.bf16.mxu0 %v879
    %1016 = vmatpush1.bf16.msra.mxu0 %v878
    %1017 = vmatprep.subr.bf16.mxu0 %v881
    %1018 = vmatpush1.bf16.msra.mxu0 %v880
    %1019 = vmatprep.subr.bf16.mxu0 %v883
    %1020 = vmatpush1.bf16.msra.mxu0 %v882
    %1021 = vmatprep.subr.bf16.mxu0 %v885
    %1022 = vmatpush1.bf16.msra.mxu0 %v884
    %1023 = vmatprep.subr.bf16.mxu0 %v887
    %1024 = vmatpush1.bf16.msra.mxu0 %v886
    %1025 = vmatprep.subr.bf16.mxu0 %v889
    %1026 = vmatpush1.bf16.msra.mxu0 %v888
    %1027 = vmatprep.subr.bf16.mxu0 %v891
    %1028 = vmatpush1.bf16.msra.mxu0 %v890
    %1029 = vmatprep.mubr.bf16.mxu0 %v571
    %1030 = vmatmul.mubr.bf16.gmra.mrb[0].mxu0 %v570
    %v1031 = vpop.f32.mrb[0].mxu0
    %v1032 = vadd.f32 %v991, %v1031
    %v1033 = vpop.f32.mrb[0].mxu0
    %v1034 = vadd.f32 %v993, %v1033
    %v1035 = vpop.f32.mrb[0].mxu0
    %v1036 = vpop.f32.mrb[0].mxu0
    %1037 = vdwg.mxu0
    %v1038 = vld [vmem:[%s6] sm:$0x3]
    %v1039 = vld [vmem:[%s7] sm:$0x3]
    %v1040 = vrot.slane %v1032, 4
    %v1041 = vadd.f32 %v1032, %v1040
    %v1042 = vrot.slane %v1041, 2
    %v1043 = vadd.f32 %v1041, %v1042
    %v1044 = vrot.slane %v1043, 1
    %v1045 = vadd.f32 %v1043, %v1044
    %v1046 = vrot.slane %v1034, 4
    %v1047 = vadd.f32 %v1034, %v1046
    %v1048 = vrot.slane %v1047, 2
    %v1049 = vadd.f32 %v1047, %v1048
    %v1050 = vrot.slane %v1049, 1
    %v1051 = vadd.f32 %v1049, %v1050
    %v1052 = vmul.f32 %v1032, %v1032
    %v1053 = vmul.f32 %v1034, %v1034
    %v1054 = vrot.slane %v1052, 4
    %v1055 = vadd.f32 %v1052, %v1054
    %v1056 = vrot.slane %v1055, 2
    %v1057 = vadd.f32 %v1055, %v1056
    %v1058 = vrot.slane %v1057, 1
    %v1059 = vadd.f32 %v1057, %v1058
    %v1060 = vrot.slane %v1053, 4
    %v1061 = vadd.f32 %v1053, %v1060
    %v1062 = vrot.slane %v1061, 2
    %v1063 = vadd.f32 %v1061, %v1062
    %v1064 = vrot.slane %v1063, 1
    %v1065 = vadd.f32 %v1063, %v1064
    %v1066 = vmul.f32 %v1045, %v421
    %v1067 = vmul.f32 %v1051, %v421
    %v1068 = vmul.f32 %v1059, %v421
    %v1069 = vmul.f32 %v1065, %v421
    %v1070 = vmul.f32 %v1066, %v1066
    %v1071 = vmul.f32 %v1067, %v1067
    %v1072 = vsub.f32 %v1068, %v1070
    %v1073 = vsub.f32 %v1069, %v1071
    %v1074 = vmax.f32 %v1072, 0.0
    %v1075 = vmax.f32 %v1073, 0.0
    %v1076 = vadd.f32 %v1074, 1e-05
    %v1077 = vadd.f32 %v1075, 1e-05
    %v1078 = vrsqrt.pop %v1076
    %v1079 = vrsqrt.pop %v1077
    %v1082 = vcombine.low %v1078, %v1079
    %v1084 = vunpack.c.l.s4 1966171168
    %v1085 = vunpack.c.0.s8 %v1084
    %v1086 = vlaneseq
    %v1087 = vshrl.u32 %v1086, 7
    %v1088 = vsub.s32 %v1085, %v1087
    %v1089 = vrot.slane %v1082, %v1088
    %v1091 = vunpack.c.l.s4 1966171168
    %v1092 = vunpack.c.0.s8 %v1091
    %v1093 = vlaneseq
    %v1094 = vshrl.u32 %v1093, 7
    %v1095 = vsub.s32 %v1092, %v1094
    %v1096 = vrot.slane %v1089, %v1095
    %v1098 = vmul.f32 %v1038, %v1096
    %v1100 = vlaneseq
    %v1101 = vshrl.u32 %v1100, 7
    %v1102 = vsub.s32 0, %v1101
    %v1103 = vrot.slane %v1098, %v1102
    %v1104 = vlaneseq
    %v1105 = vshrl.u32 %v1104, 7
    %v1106 = vsub.s32 1, %v1105
    %v1107 = vrot.slane %v1098, %v1106
    %v1110 = vmul.f32 %v1066, %v1103
    %v1111 = vmul.f32 %v1067, %v1107
    %v1114 = vcombine.low %v1110, %v1111
    %v1116 = vunpack.c.l.s4 1966171168
    %v1117 = vunpack.c.0.s8 %v1116
    %v1118 = vlaneseq
    %v1119 = vshrl.u32 %v1118, 7
    %v1120 = vsub.s32 %v1117, %v1119
    %v1121 = vrot.slane %v1114, %v1120
    %v1123 = vunpack.c.l.s4 1966171168
    %v1124 = vunpack.c.0.s8 %v1123
    %v1125 = vlaneseq
    %v1126 = vshrl.u32 %v1125, 7
    %v1127 = vsub.s32 %v1124, %v1126
    %v1128 = vrot.slane %v1121, %v1127
    %v1130 = vsub.f32 %v1039, %v1128
    %v1131 = vmul.f32 %v1032, %v1103
    %v1132 = vmul.f32 %v1034, %v1107
    %v1134 = vlaneseq
    %v1135 = vshrl.u32 %v1134, 7
    %v1136 = vsub.s32 0, %v1135
    %v1137 = vrot.slane %v1130, %v1136
    %v1138 = vlaneseq
    %v1139 = vshrl.u32 %v1138, 7
    %v1140 = vsub.s32 1, %v1139
    %v1141 = vrot.slane %v1130, %v1140
    %v1144 = vadd.f32 %v1131, %v1137
    %v1145 = vadd.f32 %v1132, %v1141
    %v1146 = vmax.f32 %v1144, 0.0
    %v1147 = vmax.f32 %v1145, 0.0
    %v1148 = vpack.c.bf16 %v1146, %v1146
    %v1149 = vpack.c.bf16 %v1147, %v1147
    %v1150 = vld [vmem:[#allocation9] sm:$0xf]
    %v1151 = vld [vmem:[#allocation9 + $0x4] sm:$0xf]
    %v1152 = vld [vmem:[#allocation9 + $0x8] sm:$0xf]
    %v1153 = vld [vmem:[#allocation9 + $0xc] sm:$0xf]
    %v1154 = vld [vmem:[#allocation9 + $0x10] sm:$0xf]
    %v1155 = vld [vmem:[#allocation9 + $0x14] sm:$0xf]
    %v1156 = vld [vmem:[#allocation9 + $0x18] sm:$0xf]
    %v1157 = vld [vmem:[#allocation9 + $0x1c] sm:$0xf]
    %v1158 = vld [vmem:[#allocation9 + $0x20] sm:$0xf]
    %v1159 = vld [vmem:[#allocation9 + $0x24] sm:$0xf]
    %v1160 = vld [vmem:[#allocation9 + $0x28] sm:$0xf]
    %v1161 = vld [vmem:[#allocation9 + $0x2c] sm:$0xf]
    %v1162 = vld [vmem:[#allocation9 + $0x30] sm:$0xf]
    %v1163 = vld [vmem:[#allocation9 + $0x34] sm:$0xf]
    %v1164 = vld [vmem:[#allocation9 + $0x38] sm:$0xf]
    %v1165 = vld [vmem:[#allocation9 + $0x3c] sm:$0xf]
    %v1166 = vld [vmem:[#allocation9 + $0x40] sm:$0xf]
    %v1167 = vld [vmem:[#allocation9 + $0x44] sm:$0xf]
    %v1168 = vld [vmem:[#allocation9 + $0x48] sm:$0xf]
    %v1169 = vld [vmem:[#allocation9 + $0x4c] sm:$0xf]
    %v1170 = vld [vmem:[#allocation9 + $0x50] sm:$0xf]
    %v1171 = vld [vmem:[#allocation9 + $0x54] sm:$0xf]
    %v1172 = vld [vmem:[#allocation9 + $0x58] sm:$0xf]
    %v1173 = vld [vmem:[#allocation9 + $0x5c] sm:$0xf]
    %v1174 = vld [vmem:[#allocation9 + $0x60] sm:$0xf]
    %v1175 = vld [vmem:[#allocation9 + $0x64] sm:$0xf]
    %v1176 = vld [vmem:[#allocation9 + $0x68] sm:$0xf]
    %v1177 = vld [vmem:[#allocation9 + $0x6c] sm:$0xf]
    %v1178 = vld [vmem:[#allocation9 + $0x70] sm:$0xf]
    %v1179 = vld [vmem:[#allocation9 + $0x74] sm:$0xf]
    %v1180 = vld [vmem:[#allocation9 + $0x78] sm:$0xf]
    %v1181 = vld [vmem:[#allocation9 + $0x7c] sm:$0xf]
    %v1182 = vld [vmem:[%s9] sm:$0x1]
    %v1184 = vlaneseq
    %v1185 = vshrl.u32 %v1184, 7
    %v1186 = vsub.s32 0, %v1185
    %v1187 = vrot.slane %v1182, %v1186
    %v1221 = vunpack.c.l.b16 %v1150
    %v1222 = vunpack.c.l.b16 %v1151
    %v1223 = vunpack.c.l.b16 %v1152
    %v1224 = vunpack.c.l.b16 %v1153
    %v1225 = vunpack.c.l.b16 %v1154
    %v1226 = vunpack.c.l.b16 %v1155
    %v1227 = vunpack.c.l.b16 %v1156
    %v1228 = vunpack.c.l.b16 %v1157
    %v1229 = vunpack.c.l.b16 %v1158
    %v1230 = vunpack.c.l.b16 %v1159
    %v1231 = vunpack.c.l.b16 %v1160
    %v1232 = vunpack.c.l.b16 %v1161
    %v1233 = vunpack.c.l.b16 %v1162
    %v1234 = vunpack.c.l.b16 %v1163
    %v1235 = vunpack.c.l.b16 %v1164
    %v1236 = vunpack.c.l.b16 %v1165
    %v1237 = vunpack.c.l.b16 %v1166
    %v1238 = vunpack.c.l.b16 %v1167
    %v1239 = vunpack.c.l.b16 %v1168
    %v1240 = vunpack.c.l.b16 %v1169
    %v1241 = vunpack.c.l.b16 %v1170
    %v1242 = vunpack.c.l.b16 %v1171
    %v1243 = vunpack.c.l.b16 %v1172
    %v1244 = vunpack.c.l.b16 %v1173
    %v1245 = vunpack.c.l.b16 %v1174
    %v1246 = vunpack.c.l.b16 %v1175
    %v1247 = vunpack.c.l.b16 %v1176
    %v1248 = vunpack.c.l.b16 %v1177
    %v1249 = vunpack.c.l.b16 %v1178
    %v1250 = vunpack.c.l.b16 %v1179
    %v1251 = vunpack.c.l.b16 %v1180
    %v1252 = vunpack.c.l.b16 %v1181
    %v1253 = vpack.c.b16 %v1222, %v1221
    %v1254 = vpack.c.b16 %v1224, %v1223
    %v1255 = vpack.c.b16 %v1226, %v1225
    %v1256 = vpack.c.b16 %v1228, %v1227
    %v1257 = vpack.c.b16 %v1230, %v1229
    %v1258 = vpack.c.b16 %v1232, %v1231
    %v1259 = vpack.c.b16 %v1234, %v1233
    %v1260 = vpack.c.b16 %v1236, %v1235
    %v1261 = vpack.c.b16 %v1238, %v1237
    %v1262 = vpack.c.b16 %v1240, %v1239
    %v1263 = vpack.c.b16 %v1242, %v1241
    %v1264 = vpack.c.b16 %v1244, %v1243
    %v1265 = vpack.c.b16 %v1246, %v1245
    %v1266 = vpack.c.b16 %v1248, %v1247
    %v1267 = vpack.c.b16 %v1250, %v1249
    %v1268 = vpack.c.b16 %v1252, %v1251
    %1285 = vmatprep.subr.bf16.mxu0 0
    %1286 = vmatpush1.bf16.msra.mxu0 %v1253
    %1287 = vmatprep.subr.bf16.mxu0 0
    %1288 = vmatpush1.bf16.msra.mxu0 %v1254
    %1289 = vmatprep.subr.bf16.mxu0 0
    %1290 = vmatpush1.bf16.msra.mxu0 %v1255
    %1291 = vmatprep.subr.bf16.mxu0 0
    %1292 = vmatpush1.bf16.msra.mxu0 %v1256
    %1293 = vmatprep.subr.bf16.mxu0 0
    %1294 = vmatpush1.bf16.msra.mxu0 %v1257
    %1295 = vmatprep.subr.bf16.mxu0 0
    %1296 = vmatpush1.bf16.msra.mxu0 %v1258
    %1297 = vmatprep.subr.bf16.mxu0 0
    %1298 = vmatpush1.bf16.msra.mxu0 %v1259
    %1299 = vmatprep.subr.bf16.mxu0 0
    %1300 = vmatpush1.bf16.msra.mxu0 %v1260
    %1301 = vmatprep.subr.bf16.mxu0 0
    %1302 = vmatpush1.bf16.msra.mxu0 %v1261
    %1303 = vmatprep.subr.bf16.mxu0 0
    %1304 = vmatpush1.bf16.msra.mxu0 %v1262
    %1305 = vmatprep.subr.bf16.mxu0 0
    %1306 = vmatpush1.bf16.msra.mxu0 %v1263
    %1307 = vmatprep.subr.bf16.mxu0 0
    %1308 = vmatpush1.bf16.msra.mxu0 %v1264
    %1309 = vmatprep.subr.bf16.mxu0 0
    %1310 = vmatpush1.bf16.msra.mxu0 %v1265
    %1311 = vmatprep.subr.bf16.mxu0 0
    %1312 = vmatpush1.bf16.msra.mxu0 %v1266
    %1313 = vmatprep.subr.bf16.mxu0 0
    %1314 = vmatpush1.bf16.msra.mxu0 %v1267
    %1315 = vmatprep.subr.bf16.mxu0 0
    %1316 = vmatpush1.bf16.msra.mxu0 %v1268
    %1317 = vmatprep.mubr.bf16.mxu0 %v1149
    %1318 = vmatmul.mubr.bf16.gmra.mrb[0].mxu0 %v1148
    %v1319 = vpop.f32.mrb[0].mxu0
    %v1320 = vadd.f32 %v1187, %v1319
    %v1321 = vpop.f32.mrb[0].mxu0
    %v1322 = vpop.f32.mrb[0].mxu0
    %v1323 = vpop.f32.mrb[0].mxu0
    %1324 = vdwg.mxu0
    %1325 = vst [vmem:[#allocation11] sm:$0xff] %v1320
    // Predicated region
    $region58: #{tpu_custom_call.1} parent=1 // pred_check
      _
    $region59: #{tpu_custom_call.1} parent=1 // pred_check_branch
      %1327 = sbr.rel (0) target = $region61
    $region60: #{tpu_custom_call.1} parent=1 // pred_region
      %s1329 = ssub.s32 128, 128
      %1330 = vsyncadd [#allocation5], %s1329
      %s1332 = sshll.u32 [#allocation11], 4
      %s1333 = int_to_ptr.vmem [resolvable:$true] %s1332
      %1335 = dma.vmem_to_hbm [thread:$0]  %s1333, 128, %s10, [#allocation5]
    $region61: #{tpu_custom_call.1} parent=1 // pred_fallthru
      _
    // Predicated region
    $region62: #{tpu_custom_call.1} parent=1 // pred_check
      _
    $region63: #{tpu_custom_call.1} parent=1 // pred_check_branch
      %1337 = sbr.rel (0) target = $region65
    $region64: #{tpu_custom_call.1} parent=1 // pred_region
      %1338 = dma.done [#allocation5], 128
    $region65: #{tpu_custom_call.1} parent=1 // pred_fallthru
      _
    %1339 = vsyncpa [#allocation4], 1
    %1340 = vsyncpa [#allocation7], 1
    %1341 = vsyncpa [#allocation10], 1
    %1342 = vsyncpa [#allocation5], 1

</llo_original>
